<compile_context>
chip_gen: v6e
topology: v6e:2x2x1
jax: 0.10.0
libtpu: 0.0.40
codegen_flags: <defaults>
</compile_context>

<pallas_src>
import jax
import jax.numpy as jnp
from jax.experimental import pallas as pl
from jax.experimental.pallas import tpu as pltpu


# ---------------------------------------------------------------------------
# Kernel
# ---------------------------------------------------------------------------
def _make_kernel(segmented: bool):
    """Fused fc1->tanh->fc2->tanh->fc3->tanh->l1->softmax.

    When `segmented` is True, each VMEM row holds `pack` independent batch
    rows side by side (block-diagonal weights), and the softmax denominator is
    a per-16-lane-segment sum computed with a block-diagonal ones matrix on
    the MXU — so every VPU/EUP op and the output store run at full lane width.
    """

    def kernel(x_ref, w1_ref, b1_ref, w2_ref, b2_ref, w3_ref, b3_ref,
               w4_ref, b4_ref, *rest):
        if segmented:
            seg_ref, o_ref = rest
        else:
            (o_ref,) = rest

        h = jnp.tanh(
            jnp.dot(x_ref[...], w1_ref[...],
                    preferred_element_type=jnp.float32) + b1_ref[...])
        h = jnp.tanh(
            jnp.dot(h, w2_ref[...],
                    preferred_element_type=jnp.float32) + b2_ref[...])
        h = jnp.tanh(
            jnp.dot(h, w3_ref[...],
                    preferred_element_type=jnp.float32) + b3_ref[...])
        logits = (jnp.dot(h, w4_ref[...],
                          preferred_element_type=jnp.float32) + b4_ref[...])

        # Numerically-stable softmax.  With lane packing the max is taken over
        # the whole packed row; subtracting a shared constant from every
        # segment leaves each segment's softmax mathematically unchanged, and
        # tanh-bounded activations keep the logit range tiny anyway.
        m = jnp.max(logits, axis=-1, keepdims=True)
        e = jnp.exp(logits - m)
        if segmented:
            # Segmented sum, broadcast back to every lane of its segment.
            denom = jnp.dot(e, seg_ref[...],
                            preferred_element_type=jnp.float32)
        else:
            denom = jnp.sum(e, axis=-1, keepdims=True)
        # Exact divide (approx reciprocal previously broke the row-sum check).
        o_ref[...] = (e / denom).astype(o_ref.dtype)

    return kernel


# ---------------------------------------------------------------------------
# Packing / tiling heuristics
# ---------------------------------------------------------------------------
def _num_tensorcores():
    """2 TensorCores per chip on v7x, 1 on v5e/v6e (and on CPU/interpret)."""
    try:
        kind = jax.devices()[0].device_kind.lower()
        if "tpu" in kind and ("v7" in kind or "7x" in kind):
            return 2
    except Exception:
        pass
    return 1


def _choose_pack(batch, dims, *, max_packed_width=512):
    """How many batch rows to fold into the lane axis (block-diag weights)."""
    if max(dims) >= 128:        # already lane-dense enough; packing not worth it
        return 1
    pack = 1
    for p in (2, 4, 8, 16):
        if batch % p == 0 and p * max(dims) <= max_packed_width:
            pack = p
    return pack


def _choose_tile_rows(n_rows, row_bytes, num_cores, *,
                      vmem_budget=6 * 1024 * 1024, hard_cap=4096):
    """Largest 8-aligned divisor of n_rows within a VMEM budget.

    v5e/v6e (1 TC): one tile as big as possible (no wasted serial grid steps).
    v7x (2 TC): prefer an even tile count so both TensorCores get a full tile.
    """
    if n_rows % 8 != 0:
        return n_rows                      # full-extent block is always legal
    cap = min(hard_cap,
              max(8, (vmem_budget // max(row_bytes, 1)) // 8 * 8),
              n_rows)
    best = 8
    t = 8
    while t <= cap:
        if n_rows % t == 0:
            best = t
        t += 8
    if num_cores > 1:
        t = best
        while t >= 8:
            if n_rows % t == 0 and (n_rows // t) % num_cores == 0:
                return t
            t -= 8
    return best


# ---------------------------------------------------------------------------
# One-time parameter preparation (outside the hot path — no per-call casts)
# ---------------------------------------------------------------------------
def prepare_params(params, pack):
    """Pack nn.Linear weights ([in,out] layout) into block-diagonal f32 form."""
    prepared = {"pack": int(pack),
                "in_dim": int(params["w1"].shape[0]),
                "out_dim": int(params["w4"].shape[1])}
    for n in range(1, 5):
        w = params[f"w{n}"].astype(jnp.float32)            # [in, out]
        b = params[f"b{n}"].astype(jnp.float32).reshape(1, -1)
        if pack > 1:
            w = jnp.kron(jnp.eye(pack, dtype=w.dtype), w)  # block-diagonal
            b = jnp.tile(b, (1, pack))
        prepared[f"w{n}"] = w
        prepared[f"b{n}"] = b
    if pack > 1:
        packed_out = pack * prepared["out_dim"]
        seg_id = jnp.arange(packed_out) // prepared["out_dim"]
        prepared["seg"] = (seg_id[:, None] == seg_id[None, :]).astype(jnp.float32)
    else:
        prepared["seg"] = None
    return prepared


# ---------------------------------------------------------------------------
# Forward
# ---------------------------------------------------------------------------
def rnn1_forward(x, prepared, *, tile_rows=None):
    """x: (B, input_size) f32.  `prepared` comes from prepare_params()."""
    pack = prepared["pack"]
    in_dim = prepared["in_dim"]
    out_dim = prepared["out_dim"]
    B, xd = x.shape
    assert xd == in_dim
    assert B % pack == 0, "batch must be divisible by the row-packing factor"

    w1, b1 = prepared["w1"], prepared["b1"]
    w2, b2 = prepared["w2"], prepared["b2"]
    w3, b3 = prepared["w3"], prepared["b3"]
    w4, b4 = prepared["w4"], prepared["b4"]
    seg = prepared["seg"]
    segmented = pack > 1

    Bp = B // pack
    packed_in = pack * in_dim
    packed_out = pack * out_dim
    # Free, contiguous HBM reshape: `pack` rows side by side on the lane axis.
    xp = x.astype(jnp.float32).reshape(Bp, packed_in)

    if tile_rows is None:
        # Rough per-packed-row VMEM cost: double-buffered in/out blocks plus
        # the live packed activations.
        act_width = w1.shape[1] + w2.shape[1] + w3.shape[1] + packed_out
        row_bytes = 4 * (2 * (packed_in + packed_out) + act_width)
        tile_rows = _choose_tile_rows(Bp, row_bytes, _num_tensorcores())
    assert Bp % tile_rows == 0, "packed batch must divide by tile_rows"

    inputs = [xp, w1, b1, w2, b2, w3, b3, w4, b4]

    def fixed(a):  # grid-invariant weight / bias / segment blocks
        return pl.BlockSpec(a.shape, lambda i: (0, 0))

    in_specs = [pl.BlockSpec((tile_rows, packed_in), lambda i: (i, 0))]
    in_specs += [fixed(a) for a in (w1, b1, w2, b2, w3, b3, w4, b4)]
    if segmented:
        inputs.append(seg)
        in_specs.append(fixed(seg))
    out_spec = pl.BlockSpec((tile_rows, packed_out), lambda i: (i, 0))

    h1 = w1.shape[1] // pack
    h2 = w2.shape[1] // pack
    h3 = w3.shape[1] // pack
    flops = 2 * B * (in_dim * h1 + h1 * h2 + h2 * h3 + h3 * out_dim)
    if segmented:
        flops += 2 * Bp * packed_out * packed_out      # segmented-sum matmul
    transcendentals = B * (h1 + h2 + h3 + out_dim)     # 3x tanh + exp
    bytes_accessed = 4 * (
        xp.size + Bp * packed_out
        + sum(a.size for a in (w1, b1, w2, b2, w3, b3, w4, b4))
        + (seg.size if segmented else 0))

    out = pl.pallas_call(
        _make_kernel(segmented),
        out_shape=jax.ShapeDtypeStruct((Bp, packed_out), jnp.float32),
        grid_spec=pltpu.PrefetchScalarGridSpec(
            num_scalar_prefetch=0,
            grid=(Bp // tile_rows,),
            in_specs=in_specs,
            out_specs=out_spec,
        ),
        compiler_params=pltpu.CompilerParams(
            dimension_semantics=("parallel",)),
        cost_estimate=pl.CostEstimate(
            flops=flops,
            transcendentals=transcendentals,
            bytes_accessed=bytes_accessed),
    )(*inputs)
    return out.reshape(B, out_dim)


# ---------------------------------------------------------------------------
# Reference, init, test
# ---------------------------------------------------------------------------
def rnn1_reference(x, params):
    """Pure-JAX f32 reference matching the PyTorch forward()."""
    hp = jax.lax.Precision.HIGHEST
    h = jnp.tanh(jnp.dot(x, params["w1"], precision=hp) + params["b1"])
    h = jnp.tanh(jnp.dot(h, params["w2"], precision=hp) + params["b2"])
    h = jnp.tanh(jnp.dot(h, params["w3"], precision=hp) + params["b3"])
    logits = jnp.dot(h, params["w4"], precision=hp) + params["b4"]
    return jax.nn.softmax(logits, axis=-1)


def init_params(key, input_size, h1, h2, h3, out_size):
    """Deterministic init mimicking nn.Linear's U(-1/sqrt(fan_in), +1/sqrt(fan_in))."""
    dims = [(input_size, h1), (h1, h2), (h2, h3), (h3, out_size)]
    params = {}
    keys = jax.random.split(key, 2 * len(dims))
    for n, (fan_in, fan_out) in enumerate(dims, start=1):
        bound = 1.0 / jnp.sqrt(jnp.float32(fan_in))
        kw, kb = keys[2 * (n - 1)], keys[2 * (n - 1) + 1]
        params[f"w{n}"] = jax.random.uniform(
            kw, (fan_in, fan_out), jnp.float32, -bound, bound)
        params[f"b{n}"] = jax.random.uniform(
            kb, (1, fan_out), jnp.float32, -bound, bound)
    return params


if __name__ == "__main__":
    key = jax.random.PRNGKey(0)
    k_x, k_p = jax.random.split(key)

    B = 8
    input_size, h1, h2, h3, out_size = 16, 32, 32, 32, 16

    x = jax.random.normal(k_x, (B, input_size), jnp.float32)
    params = init_params(k_p, input_size, h1, h2, h3, out_size)

    # One-time packing (outside the hot path): pack=8 here -> 128-lane in/out.
    pack = _choose_pack(B, (input_size, h1, h2, h3, out_size))
    prepared = prepare_params(params, pack)

    out = rnn1_forward(x, prepared)
    out = jax.block_until_ready(out)

    # Sanity: shape, softmax rows sum to ~1, close to the f32 reference.
    ref = rnn1_reference(x, params)
    row_sums = jnp.sum(out, axis=-1)
    assert out.shape == (B, out_size)
    assert bool(jnp.all(jnp.abs(row_sums - 1.0) < 1e-2)), row_sums
    assert bool(jnp.max(jnp.abs(out - ref)) < 2e-2), jnp.max(jnp.abs(out - ref))

    print("KERNEL_OK")
</pallas_src>

<mosaic_0001>
module attributes {stable_mosaic.version = 11 : i64} {
  func.func @kernel(%arg0: i32, %arg1: memref<1x128xf32, #tpu.memory_space<vmem>>, %arg2: memref<128x256xf32, #tpu.memory_space<vmem>>, %arg3: memref<1x256xf32, #tpu.memory_space<vmem>>, %arg4: memref<256x256xf32, #tpu.memory_space<vmem>>, %arg5: memref<1x256xf32, #tpu.memory_space<vmem>>, %arg6: memref<256x256xf32, #tpu.memory_space<vmem>>, %arg7: memref<1x256xf32, #tpu.memory_space<vmem>>, %arg8: memref<256x128xf32, #tpu.memory_space<vmem>>, %arg9: memref<1x128xf32, #tpu.memory_space<vmem>>, %arg10: memref<128x128xf32, #tpu.memory_space<vmem>>, %arg11: memref<1x128xf32, #tpu.memory_space<vmem>>) attributes {dimension_semantics = [#tpu.dimension_semantics<parallel>], iteration_bounds = array<i64: 1>, scalar_prefetch = 0 : i64, scratch_operands = 0 : i64, tpu.core_type = #tpu.core_type<tc>, window_params = [{transform_indices = @transform_0, window_bounds = array<i64: 1, 128>}, {pipeline_mode = #tpu.pipeline_mode<synchronous>, transform_indices = @transform_1, window_bounds = array<i64: 128, 256>}, {pipeline_mode = #tpu.pipeline_mode<synchronous>, transform_indices = @transform_2, window_bounds = array<i64: 1, 256>}, {pipeline_mode = #tpu.pipeline_mode<synchronous>, transform_indices = @transform_3, window_bounds = array<i64: 256, 256>}, {pipeline_mode = #tpu.pipeline_mode<synchronous>, transform_indices = @transform_4, window_bounds = array<i64: 1, 256>}, {pipeline_mode = #tpu.pipeline_mode<synchronous>, transform_indices = @transform_5, window_bounds = array<i64: 256, 256>}, {pipeline_mode = #tpu.pipeline_mode<synchronous>, transform_indices = @transform_6, window_bounds = array<i64: 1, 256>}, {pipeline_mode = #tpu.pipeline_mode<synchronous>, transform_indices = @transform_7, window_bounds = array<i64: 256, 128>}, {pipeline_mode = #tpu.pipeline_mode<synchronous>, transform_indices = @transform_8, window_bounds = array<i64: 1, 128>}, {pipeline_mode = #tpu.pipeline_mode<synchronous>, transform_indices = @transform_9, window_bounds = array<i64: 128, 128>}, {transform_indices = @transform_10, window_bounds = array<i64: 1, 128>}]} {
    %c0 = arith.constant 0 : index
    %c0_0 = arith.constant 0 : index
    %0 = vector.load %arg1[%c0, %c0_0] : memref<1x128xf32, #tpu.memory_space<vmem>>, vector<1x128xf32>
    %c0_1 = arith.constant 0 : index
    %c0_2 = arith.constant 0 : index
    %1 = vector.load %arg2[%c0_1, %c0_2] : memref<128x256xf32, #tpu.memory_space<vmem>>, vector<128x256xf32>
    %cst = arith.constant dense<0.000000e+00> : vector<1x256xf32>
    %2 = tpu.matmul %0, %1, %cst {dimension_numbers = #tpu.dot_dimension_numbers<[1], [0], [0], [1], [0, 0, 1, 1], [], []>} : vector<1x128xf32>, vector<128x256xf32>, vector<1x256xf32> -> vector<1x256xf32>
    %c0_3 = arith.constant 0 : index
    %c0_4 = arith.constant 0 : index
    %3 = vector.load %arg3[%c0_3, %c0_4] : memref<1x256xf32, #tpu.memory_space<vmem>>, vector<1x256xf32>
    %4 = arith.addf %2, %3 : vector<1x256xf32>
    %5 = math.tanh %4 : vector<1x256xf32>
    %c0_5 = arith.constant 0 : index
    %c0_6 = arith.constant 0 : index
    %6 = vector.load %arg4[%c0_5, %c0_6] : memref<256x256xf32, #tpu.memory_space<vmem>>, vector<256x256xf32>
    %cst_7 = arith.constant dense<0.000000e+00> : vector<1x256xf32>
    %7 = tpu.matmul %5, %6, %cst_7 {dimension_numbers = #tpu.dot_dimension_numbers<[1], [0], [0], [1], [0, 0, 1, 1], [], []>} : vector<1x256xf32>, vector<256x256xf32>, vector<1x256xf32> -> vector<1x256xf32>
    %c0_8 = arith.constant 0 : index
    %c0_9 = arith.constant 0 : index
    %8 = vector.load %arg5[%c0_8, %c0_9] : memref<1x256xf32, #tpu.memory_space<vmem>>, vector<1x256xf32>
    %9 = arith.addf %7, %8 : vector<1x256xf32>
    %10 = math.tanh %9 : vector<1x256xf32>
    %c0_10 = arith.constant 0 : index
    %c0_11 = arith.constant 0 : index
    %11 = vector.load %arg6[%c0_10, %c0_11] : memref<256x256xf32, #tpu.memory_space<vmem>>, vector<256x256xf32>
    %cst_12 = arith.constant dense<0.000000e+00> : vector<1x256xf32>
    %12 = tpu.matmul %10, %11, %cst_12 {dimension_numbers = #tpu.dot_dimension_numbers<[1], [0], [0], [1], [0, 0, 1, 1], [], []>} : vector<1x256xf32>, vector<256x256xf32>, vector<1x256xf32> -> vector<1x256xf32>
    %c0_13 = arith.constant 0 : index
    %c0_14 = arith.constant 0 : index
    %13 = vector.load %arg7[%c0_13, %c0_14] : memref<1x256xf32, #tpu.memory_space<vmem>>, vector<1x256xf32>
    %14 = arith.addf %12, %13 : vector<1x256xf32>
    %15 = math.tanh %14 : vector<1x256xf32>
    %c0_15 = arith.constant 0 : index
    %c0_16 = arith.constant 0 : index
    %16 = vector.load %arg8[%c0_15, %c0_16] : memref<256x128xf32, #tpu.memory_space<vmem>>, vector<256x128xf32>
    %cst_17 = arith.constant dense<0.000000e+00> : vector<1x128xf32>
    %17 = tpu.matmul %15, %16, %cst_17 {dimension_numbers = #tpu.dot_dimension_numbers<[1], [0], [0], [1], [0, 0, 1, 1], [], []>} : vector<1x256xf32>, vector<256x128xf32>, vector<1x128xf32> -> vector<1x128xf32>
    %c0_18 = arith.constant 0 : index
    %c0_19 = arith.constant 0 : index
    %18 = vector.load %arg9[%c0_18, %c0_19] : memref<1x128xf32, #tpu.memory_space<vmem>>, vector<1x128xf32>
    %19 = arith.addf %17, %18 : vector<1x128xf32>
    %cst_20 = arith.constant dense<0xFF800000> : vector<1xf32>
    %20 = vector.multi_reduction <maximumf>, %19, %cst_20 [1] : vector<1x128xf32> to vector<1xf32>
    %21 = vector.shape_cast %20 : vector<1xf32> to vector<1x1xf32>
    %22 = vector.broadcast %21 : vector<1x1xf32> to vector<1x128xf32>
    %23 = arith.subf %19, %22 : vector<1x128xf32>
    %24 = math.exp %23 : vector<1x128xf32>
    %c0_21 = arith.constant 0 : index
    %c0_22 = arith.constant 0 : index
    %25 = vector.load %arg10[%c0_21, %c0_22] : memref<128x128xf32, #tpu.memory_space<vmem>>, vector<128x128xf32>
    %cst_23 = arith.constant dense<0.000000e+00> : vector<1x128xf32>
    %26 = tpu.matmul %24, %25, %cst_23 {dimension_numbers = #tpu.dot_dimension_numbers<[1], [0], [0], [1], [0, 0, 1, 1], [], []>} : vector<1x128xf32>, vector<128x128xf32>, vector<1x128xf32> -> vector<1x128xf32>
    %27 = arith.divf %24, %26 : vector<1x128xf32>
    %c0_24 = arith.constant 0 : index
    %c0_25 = arith.constant 0 : index
    %28 = vector.load %arg11[%c0_24, %c0_25] : memref<1x128xf32, #tpu.memory_space<vmem>>, vector<1x128xf32>
    tpu.vector_store %arg11[%c0_24, %c0_25], %27 {strides = array<i32>} : memref<1x128xf32, #tpu.memory_space<vmem>>, vector<1x128xf32>,
    return
  }
  func.func @transform_0(%arg0: i32) -> (i32, i32) {
    %c0_i32 = arith.constant 0 : i32
    %c0_i32_0 = arith.constant 0 : i32
    return %arg0, %c0_i32 : i32, i32
  }
  func.func @transform_1(%arg0: i32) -> (i32, i32) {
    %c0_i32 = arith.constant 0 : i32
    %c0_i32_0 = arith.constant 0 : i32
    %c0_i32_1 = arith.constant 0 : i32
    return %c0_i32, %c0_i32_0 : i32, i32
  }
  func.func @transform_2(%arg0: i32) -> (i32, i32) {
    %c0_i32 = arith.constant 0 : i32
    %c0_i32_0 = arith.constant 0 : i32
    %c0_i32_1 = arith.constant 0 : i32
    return %c0_i32, %c0_i32_0 : i32, i32
  }
  func.func @transform_3(%arg0: i32) -> (i32, i32) {
    %c0_i32 = arith.constant 0 : i32
    %c0_i32_0 = arith.constant 0 : i32
    %c0_i32_1 = arith.constant 0 : i32
    return %c0_i32, %c0_i32_0 : i32, i32
  }
  func.func @transform_4(%arg0: i32) -> (i32, i32) {
    %c0_i32 = arith.constant 0 : i32
    %c0_i32_0 = arith.constant 0 : i32
    %c0_i32_1 = arith.constant 0 : i32
    return %c0_i32, %c0_i32_0 : i32, i32
  }
  func.func @transform_5(%arg0: i32) -> (i32, i32) {
    %c0_i32 = arith.constant 0 : i32
    %c0_i32_0 = arith.constant 0 : i32
    %c0_i32_1 = arith.constant 0 : i32
    return %c0_i32, %c0_i32_0 : i32, i32
  }
  func.func @transform_6(%arg0: i32) -> (i32, i32) {
    %c0_i32 = arith.constant 0 : i32
    %c0_i32_0 = arith.constant 0 : i32
    %c0_i32_1 = arith.constant 0 : i32
    return %c0_i32, %c0_i32_0 : i32, i32
  }
  func.func @transform_7(%arg0: i32) -> (i32, i32) {
    %c0_i32 = arith.constant 0 : i32
    %c0_i32_0 = arith.constant 0 : i32
    %c0_i32_1 = arith.constant 0 : i32
    return %c0_i32, %c0_i32_0 : i32, i32
  }
  func.func @transform_8(%arg0: i32) -> (i32, i32) {
    %c0_i32 = arith.constant 0 : i32
    %c0_i32_0 = arith.constant 0 : i32
    %c0_i32_1 = arith.constant 0 : i32
    return %c0_i32, %c0_i32_0 : i32, i32
  }
  func.func @transform_9(%arg0: i32) -> (i32, i32) {
    %c0_i32 = arith.constant 0 : i32
    %c0_i32_0 = arith.constant 0 : i32
    %c0_i32_1 = arith.constant 0 : i32
    return %c0_i32, %c0_i32_0 : i32, i32
  }
  func.func @transform_10(%arg0: i32) -> (i32, i32) {
    %c0_i32 = arith.constant 0 : i32
    %c0_i32_0 = arith.constant 0 : i32
    return %arg0, %c0_i32 : i32, i32
  }
}

</mosaic_0001>

<llo_original>
// kernel: tpu_custom_call.1
$region0: #{tpu_custom_call.1}
  #allocation0 [shape = 'u32[]', space=smem, size = 0x4, offset = 0x4, fixed_abs, tag = 'smem constant byte address 0x4 - core index']
  #allocation1 [shape = 'u32[144,128]{1,0:T(1,128)}', space=vmem, size = 0x12000, scoped, tag = 'internal scratch']
  %s0 = inlined_call_operand.hbm [shape: f32[1,128], index: 0, kind: input, shape index: {}]
  %s1 = inlined_call_operand.hbm [shape: f32[128,256], index: 1, kind: input, shape index: {}]
  %s2 = inlined_call_operand.vmem [shape: f32[1,256], index: 2, kind: input, shape index: {}]
  %s3 = inlined_call_operand.hbm [shape: f32[256,256], index: 3, kind: input, shape index: {}]
  %s4 = inlined_call_operand.vmem [shape: f32[1,256], index: 4, kind: input, shape index: {}]
  %s5 = inlined_call_operand.hbm [shape: f32[256,256], index: 5, kind: input, shape index: {}]
  %s6 = inlined_call_operand.vmem [shape: f32[1,256], index: 6, kind: input, shape index: {}]
  %s7 = inlined_call_operand.hbm [shape: f32[256,128], index: 7, kind: input, shape index: {}]
  %s8 = inlined_call_operand.vmem [shape: f32[1,128], index: 8, kind: input, shape index: {}]
  %s9 = inlined_call_operand.hbm [shape: f32[128,128], index: 9, kind: input, shape index: {}]
  %s10 = inlined_call_operand.hbm [shape: f32[1,128], index: 10, kind: output, shape index: {}]
  %s11 = sld [smem:[#allocation0]]
  $region74: #{tpu_custom_call.1} parent=0
    _
  %s13 = ssub.s32 1, %s11
  %s14 = scalar_select 0, %s13, %s11
  $region1: #{tpu_custom_call.1} parent=0
    #allocation2 [shape = 'u8[512]{0}', space=vmem, size = 0x400, scoped, tag = 'input window, operand 0, single buffered']
    #allocation3 [shape = 's32[1]{0}', space=sflag, size = 0x4, scoped, tag = 'scoped memory for tpu_custom_call.1']
    #allocation4 [shape = 's32[1]{0}', space=sflag, size = 0x4, scoped, tag = 'scoped memory for tpu_custom_call.1']
    #allocation5 [shape = 'u8[131072]{0}', space=vmem, size = 0x20000, scoped, tag = 'input window, operand 1, single buffered']
    #allocation6 [shape = 's32[1]{0}', space=sflag, size = 0x4, scoped, tag = 'scoped memory for tpu_custom_call.1']
    #allocation7 [shape = 'u8[262144]{0}', space=vmem, size = 0x40000, scoped, tag = 'input window, operand 3, single buffered']
    #allocation8 [shape = 'u8[262144]{0}', space=vmem, size = 0x40000, scoped, tag = 'input window, operand 5, single buffered']
    #allocation9 [shape = 's32[1]{0}', space=sflag, size = 0x4, scoped, tag = 'scoped memory for tpu_custom_call.1']
    #allocation10 [shape = 'u8[131072]{0}', space=vmem, size = 0x20000, scoped, tag = 'input window, operand 7, single buffered']
    #allocation11 [shape = 'u8[65536]{0}', space=vmem, size = 0x10000, scoped, tag = 'input window, operand 9, single buffered']
    #allocation12 [shape = 's32[1]{0}', space=sflag, size = 0x4, scoped, tag = 'scoped memory for tpu_custom_call.1']
    #allocation13 [shape = 'u8[512]{0}', space=vmem, size = 0x400, scoped, tag = 'output window, operand 0, single buffered']
    %15 = vsyncpa [#allocation3], 0
    %16 = vsyncpa [#allocation6], 0
    %17 = vsyncpa [#allocation9], 0
    %18 = vsyncpa [#allocation12], 0
    %19 = vsyncpa [#allocation4], 0
    // Predicated region
    $region2: #{tpu_custom_call.1} parent=1 // pred_check
      _
    $region3: #{tpu_custom_call.1} parent=1 // pred_check_branch
      %21 = sbr.rel (0) target = $region5
    $region4: #{tpu_custom_call.1} parent=1 // pred_region
      %s23 = ssub.s32 16, 16
      %24 = vsyncadd [#allocation3], %s23
      %s26 = sshll.u32 [#allocation2], 4
      %s27 = int_to_ptr.vmem [resolvable:$true] %s26
      %29 = dma.hbm_to_vmem [thread:$0]  %s0, 16, %s27, [#allocation3]
    $region5: #{tpu_custom_call.1} parent=1 // pred_fallthru
      _
    // Predicated region
    $region6: #{tpu_custom_call.1} parent=1 // pred_check
      _
    $region7: #{tpu_custom_call.1} parent=1 // pred_check_branch
      %31 = sbr.rel (0) target = $region9
    $region8: #{tpu_custom_call.1} parent=1 // pred_region
      %s33 = ssub.s32 4096, 4096
      %34 = vsyncadd [#allocation6], %s33
      %s35 = sshll.u32 [#allocation5], 4
      %s36 = int_to_ptr.vmem [resolvable:$true] %s35
      %41 = dma.hbm_to_vmem [thread:$0]  %s1, 4096, %s36, [#allocation6], 256, 256, 16
    $region9: #{tpu_custom_call.1} parent=1 // pred_fallthru
      _
    // Predicated region
    $region10: #{tpu_custom_call.1} parent=1 // pred_check
      _
    $region11: #{tpu_custom_call.1} parent=1 // pred_check_branch
      %43 = sbr.rel (0) target = $region13
    $region12: #{tpu_custom_call.1} parent=1 // pred_region
      _
    $region13: #{tpu_custom_call.1} parent=1 // pred_fallthru
      _
    // Predicated region
    $region14: #{tpu_custom_call.1} parent=1 // pred_check
      _
    $region15: #{tpu_custom_call.1} parent=1 // pred_check_branch
      %45 = sbr.rel (0) target = $region17
    $region16: #{tpu_custom_call.1} parent=1 // pred_region
      %s47 = ssub.s32 8192, 8192
      %48 = vsyncadd [#allocation6], %s47
      %s49 = sshll.u32 [#allocation7], 4
      %s50 = int_to_ptr.vmem [resolvable:$true] %s49
      %55 = dma.hbm_to_vmem [thread:$0]  %s3, 8192, %s50, [#allocation6], 256, 256, 16
    $region17: #{tpu_custom_call.1} parent=1 // pred_fallthru
      _
    // Predicated region
    $region18: #{tpu_custom_call.1} parent=1 // pred_check
      _
    $region19: #{tpu_custom_call.1} parent=1 // pred_check_branch
      %57 = sbr.rel (0) target = $region21
    $region20: #{tpu_custom_call.1} parent=1 // pred_region
      _
    $region21: #{tpu_custom_call.1} parent=1 // pred_fallthru
      _
    // Predicated region
    $region22: #{tpu_custom_call.1} parent=1 // pred_check
      _
    $region23: #{tpu_custom_call.1} parent=1 // pred_check_branch
      %59 = sbr.rel (0) target = $region25
    $region24: #{tpu_custom_call.1} parent=1 // pred_region
      %s61 = ssub.s32 8192, 8192
      %62 = vsyncadd [#allocation9], %s61
      %s63 = sshll.u32 [#allocation8], 4
      %s64 = int_to_ptr.vmem [resolvable:$true] %s63
      %69 = dma.hbm_to_vmem [thread:$0]  %s5, 8192, %s64, [#allocation9], 256, 256, 16
    $region25: #{tpu_custom_call.1} parent=1 // pred_fallthru
      _
    // Predicated region
    $region26: #{tpu_custom_call.1} parent=1 // pred_check
      _
    $region27: #{tpu_custom_call.1} parent=1 // pred_check_branch
      %71 = sbr.rel (0) target = $region29
    $region28: #{tpu_custom_call.1} parent=1 // pred_region
      _
    $region29: #{tpu_custom_call.1} parent=1 // pred_fallthru
      _
    // Predicated region
    $region30: #{tpu_custom_call.1} parent=1 // pred_check
      _
    $region31: #{tpu_custom_call.1} parent=1 // pred_check_branch
      %73 = sbr.rel (0) target = $region33
    $region32: #{tpu_custom_call.1} parent=1 // pred_region
      %s75 = ssub.s32 4096, 4096
      %76 = vsyncadd [#allocation9], %s75
      %s77 = sshll.u32 [#allocation10], 4
      %s78 = int_to_ptr.vmem [resolvable:$true] %s77
      %83 = dma.hbm_to_vmem [thread:$0]  %s7, 4096, %s78, [#allocation9], 128, 128, 8
    $region33: #{tpu_custom_call.1} parent=1 // pred_fallthru
      _
    // Predicated region
    $region34: #{tpu_custom_call.1} parent=1 // pred_check
      _
    $region35: #{tpu_custom_call.1} parent=1 // pred_check_branch
      %85 = sbr.rel (0) target = $region37
    $region36: #{tpu_custom_call.1} parent=1 // pred_region
      _
    $region37: #{tpu_custom_call.1} parent=1 // pred_fallthru
      _
    // Predicated region
    $region38: #{tpu_custom_call.1} parent=1 // pred_check
      _
    $region39: #{tpu_custom_call.1} parent=1 // pred_check_branch
      %87 = sbr.rel (0) target = $region41
    $region40: #{tpu_custom_call.1} parent=1 // pred_region
      %s89 = ssub.s32 2048, 2048
      %90 = vsyncadd [#allocation12], %s89
      %s91 = sshll.u32 [#allocation11], 4
      %s92 = int_to_ptr.vmem [resolvable:$true] %s91
      %97 = dma.hbm_to_vmem [thread:$0]  %s9, 2048, %s92, [#allocation12], 128, 128, 8
    $region41: #{tpu_custom_call.1} parent=1 // pred_fallthru
      _
    // Predicated region
    $region42: #{tpu_custom_call.1} parent=1 // pred_check
      _
    $region43: #{tpu_custom_call.1} parent=1 // pred_check_branch
      %99 = sbr.rel (0) target = $region45
    $region44: #{tpu_custom_call.1} parent=1 // pred_region
      %100 = dma.done [#allocation3], 16
    $region45: #{tpu_custom_call.1} parent=1 // pred_fallthru
      _
    // Predicated region
    $region46: #{tpu_custom_call.1} parent=1 // pred_check
      _
    $region47: #{tpu_custom_call.1} parent=1 // pred_check_branch
      %102 = sbr.rel (0) target = $region49
    $region48: #{tpu_custom_call.1} parent=1 // pred_region
      %103 = dma.done [#allocation6], 4096
    $region49: #{tpu_custom_call.1} parent=1 // pred_fallthru
      _
    // Predicated region
    $region50: #{tpu_custom_call.1} parent=1 // pred_check
      _
    $region51: #{tpu_custom_call.1} parent=1 // pred_check_branch
      %105 = sbr.rel (0) target = $region53
    $region52: #{tpu_custom_call.1} parent=1 // pred_region
      %106 = dma.done [#allocation6], 8192
    $region53: #{tpu_custom_call.1} parent=1 // pred_fallthru
      _
    // Predicated region
    $region54: #{tpu_custom_call.1} parent=1 // pred_check
      _
    $region55: #{tpu_custom_call.1} parent=1 // pred_check_branch
      %108 = sbr.rel (0) target = $region57
    $region56: #{tpu_custom_call.1} parent=1 // pred_region
      %109 = dma.done [#allocation9], 8192
    $region57: #{tpu_custom_call.1} parent=1 // pred_fallthru
      _
    // Predicated region
    $region58: #{tpu_custom_call.1} parent=1 // pred_check
      _
    $region59: #{tpu_custom_call.1} parent=1 // pred_check_branch
      %111 = sbr.rel (0) target = $region61
    $region60: #{tpu_custom_call.1} parent=1 // pred_region
      %112 = dma.done [#allocation9], 4096
    $region61: #{tpu_custom_call.1} parent=1 // pred_fallthru
      _
    // Predicated region
    $region62: #{tpu_custom_call.1} parent=1 // pred_check
      _
    $region63: #{tpu_custom_call.1} parent=1 // pred_check_branch
      %114 = sbr.rel (0) target = $region65
    $region64: #{tpu_custom_call.1} parent=1 // pred_region
      %115 = dma.done [#allocation12], 2048
    $region65: #{tpu_custom_call.1} parent=1 // pred_fallthru
      _
    %v116 = vld [vmem:[#allocation2] sm:$0x1]
    %v117 = vld [vmem:[#allocation5] sm:$0xff]
    %v118 = vld [vmem:[#allocation5 + $0x8] sm:$0xff]
    %v119 = vld [vmem:[#allocation5 + $0x10] sm:$0xff]
    %v120 = vld [vmem:[#allocation5 + $0x18] sm:$0xff]
    %v121 = vld [vmem:[#allocation5 + $0x20] sm:$0xff]
    %v122 = vld [vmem:[#allocation5 + $0x28] sm:$0xff]
    %v123 = vld [vmem:[#allocation5 + $0x30] sm:$0xff]
    %v124 = vld [vmem:[#allocation5 + $0x38] sm:$0xff]
    %v125 = vld [vmem:[#allocation5 + $0x40] sm:$0xff]
    %v126 = vld [vmem:[#allocation5 + $0x48] sm:$0xff]
    %v127 = vld [vmem:[#allocation5 + $0x50] sm:$0xff]
    %v128 = vld [vmem:[#allocation5 + $0x58] sm:$0xff]
    %v129 = vld [vmem:[#allocation5 + $0x60] sm:$0xff]
    %v130 = vld [vmem:[#allocation5 + $0x68] sm:$0xff]
    %v131 = vld [vmem:[#allocation5 + $0x70] sm:$0xff]
    %v132 = vld [vmem:[#allocation5 + $0x78] sm:$0xff]
    %v133 = vld [vmem:[#allocation5 + $0x80] sm:$0xff]
    %v134 = vld [vmem:[#allocation5 + $0x88] sm:$0xff]
    %v135 = vld [vmem:[#allocation5 + $0x90] sm:$0xff]
    %v136 = vld [vmem:[#allocation5 + $0x98] sm:$0xff]
    %v137 = vld [vmem:[#allocation5 + $0xa0] sm:$0xff]
    %v138 = vld [vmem:[#allocation5 + $0xa8] sm:$0xff]
    %v139 = vld [vmem:[#allocation5 + $0xb0] sm:$0xff]
    %v140 = vld [vmem:[#allocation5 + $0xb8] sm:$0xff]
    %v141 = vld [vmem:[#allocation5 + $0xc0] sm:$0xff]
    %v142 = vld [vmem:[#allocation5 + $0xc8] sm:$0xff]
    %v143 = vld [vmem:[#allocation5 + $0xd0] sm:$0xff]
    %v144 = vld [vmem:[#allocation5 + $0xd8] sm:$0xff]
    %v145 = vld [vmem:[#allocation5 + $0xe0] sm:$0xff]
    %v146 = vld [vmem:[#allocation5 + $0xe8] sm:$0xff]
    %v147 = vld [vmem:[#allocation5 + $0xf0] sm:$0xff]
    %v148 = vld [vmem:[#allocation5 + $0xf8] sm:$0xff]
    %v149 = vld [vmem:[%s2] sm:$0x3]
    %v151 = vlaneseq
    %v152 = vshrl.u32 %v151, 7
    %v153 = vsub.s32 0, %v152
    %v154 = vrot.slane %v149, %v153
    %v155 = vlaneseq
    %v156 = vshrl.u32 %v155, 7
    %v157 = vsub.s32 1, %v156
    %v158 = vrot.slane %v149, %v157
    %161 = vmatprep.subr.mxu0 %v148
    %162 = vmatpush1.msra.mxu0 %v147
    %163 = vmatprep.subr.mxu0 %v146
    %164 = vmatpush1.msra.mxu0 %v145
    %165 = vmatprep.subr.mxu0 %v144
    %166 = vmatpush1.msra.mxu0 %v143
    %167 = vmatprep.subr.mxu0 %v142
    %168 = vmatpush1.msra.mxu0 %v141
    %169 = vmatprep.subr.mxu0 %v140
    %170 = vmatpush1.msra.mxu0 %v139
    %171 = vmatprep.subr.mxu0 %v138
    %172 = vmatpush1.msra.mxu0 %v137
    %173 = vmatprep.subr.mxu0 %v136
    %174 = vmatpush1.msra.mxu0 %v135
    %175 = vmatprep.subr.mxu0 %v134
    %176 = vmatpush1.msra.mxu0 %v133
    %177 = vmatprep.subr.mxu0 %v132
    %178 = vmatpush1.msra.mxu0 %v131
    %179 = vmatprep.subr.mxu0 %v130
    %180 = vmatpush1.msra.mxu0 %v129
    %181 = vmatprep.subr.mxu0 %v128
    %182 = vmatpush1.msra.mxu0 %v127
    %183 = vmatprep.subr.mxu0 %v126
    %184 = vmatpush1.msra.mxu0 %v125
    %185 = vmatprep.subr.mxu0 %v124
    %186 = vmatpush1.msra.mxu0 %v123
    %187 = vmatprep.subr.mxu0 %v122
    %188 = vmatpush1.msra.mxu0 %v121
    %189 = vmatprep.subr.mxu0 %v120
    %190 = vmatpush1.msra.mxu0 %v119
    %191 = vmatprep.subr.mxu0 %v118
    %192 = vmatpush1.msra.mxu0 %v117
    %193 = vmatprep.subr.mxu0 0.0
    %194 = vmatpush2.msra.mxu0 0.0
    %195 = vmatprep.subr.mxu0 0.0
    %196 = vmatpush2.msra.mxu0 0.0
    %197 = vmatprep.subr.mxu0 0.0
    %198 = vmatpush2.msra.mxu0 0.0
    %199 = vmatprep.subr.mxu0 0.0
    %200 = vmatpush2.msra.mxu0 0.0
    %201 = vmatprep.subr.mxu0 0.0
    %202 = vmatpush2.msra.mxu0 0.0
    %203 = vmatprep.subr.mxu0 0.0
    %204 = vmatpush2.msra.mxu0 0.0
    %205 = vmatprep.subr.mxu0 0.0
    %206 = vmatpush2.msra.mxu0 0.0
    %207 = vmatprep.subr.mxu0 0.0
    %208 = vmatpush2.msra.mxu0 0.0
    %209 = vmatprep.subr.mxu0 0.0
    %210 = vmatpush2.msra.mxu0 0.0
    %211 = vmatprep.subr.mxu0 0.0
    %212 = vmatpush2.msra.mxu0 0.0
    %213 = vmatprep.subr.mxu0 0.0
    %214 = vmatpush2.msra.mxu0 0.0
    %215 = vmatprep.subr.mxu0 0.0
    %216 = vmatpush2.msra.mxu0 0.0
    %217 = vmatprep.subr.mxu0 0.0
    %218 = vmatpush2.msra.mxu0 0.0
    %219 = vmatprep.subr.mxu0 0.0
    %220 = vmatpush2.msra.mxu0 0.0
    %221 = vmatprep.subr.mxu0 0.0
    %222 = vmatpush2.msra.mxu0 0.0
    %223 = vmatprep.subr.mxu0 0.0
    %224 = vmatpush2.msra.mxu0 0.0
    %225 = vmatprep.mubr.f32.mxu0 0.0
    %226 = vmatmul.mubr.f32.gmra.mxu0 %v116
    %v227 = vpop.f32.mrf.mxu0
    %v228 = vadd.f32 %v154, %v227
    %v229 = vpop.f32.mrf.mxu0
    %v230 = vadd.f32 %v158, %v229
    %231 = vdwg.mxu0
    %v232 = vtanh.pop %v228
    %v233 = vtanh.pop %v230
    %v234 = vld [vmem:[#allocation7] sm:$0xff]
    %v235 = vld [vmem:[#allocation7 + $0x8] sm:$0xff]
    %v236 = vld [vmem:[#allocation7 + $0x10] sm:$0xff]
    %v237 = vld [vmem:[#allocation7 + $0x18] sm:$0xff]
    %v238 = vld [vmem:[#allocation7 + $0x20] sm:$0xff]
    %v239 = vld [vmem:[#allocation7 + $0x28] sm:$0xff]
    %v240 = vld [vmem:[#allocation7 + $0x30] sm:$0xff]
    %v241 = vld [vmem:[#allocation7 + $0x38] sm:$0xff]
    %v242 = vld [vmem:[#allocation7 + $0x40] sm:$0xff]
    %v243 = vld [vmem:[#allocation7 + $0x48] sm:$0xff]
    %v244 = vld [vmem:[#allocation7 + $0x50] sm:$0xff]
    %v245 = vld [vmem:[#allocation7 + $0x58] sm:$0xff]
    %v246 = vld [vmem:[#allocation7 + $0x60] sm:$0xff]
    %v247 = vld [vmem:[#allocation7 + $0x68] sm:$0xff]
    %v248 = vld [vmem:[#allocation7 + $0x70] sm:$0xff]
    %v249 = vld [vmem:[#allocation7 + $0x78] sm:$0xff]
    %v250 = vld [vmem:[#allocation7 + $0x80] sm:$0xff]
    %v251 = vld [vmem:[#allocation7 + $0x88] sm:$0xff]
    %v252 = vld [vmem:[#allocation7 + $0x90] sm:$0xff]
    %v253 = vld [vmem:[#allocation7 + $0x98] sm:$0xff]
    %v254 = vld [vmem:[#allocation7 + $0xa0] sm:$0xff]
    %v255 = vld [vmem:[#allocation7 + $0xa8] sm:$0xff]
    %v256 = vld [vmem:[#allocation7 + $0xb0] sm:$0xff]
    %v257 = vld [vmem:[#allocation7 + $0xb8] sm:$0xff]
    %v258 = vld [vmem:[#allocation7 + $0xc0] sm:$0xff]
    %v259 = vld [vmem:[#allocation7 + $0xc8] sm:$0xff]
    %v260 = vld [vmem:[#allocation7 + $0xd0] sm:$0xff]
    %v261 = vld [vmem:[#allocation7 + $0xd8] sm:$0xff]
    %v262 = vld [vmem:[#allocation7 + $0xe0] sm:$0xff]
    %v263 = vld [vmem:[#allocation7 + $0xe8] sm:$0xff]
    %v264 = vld [vmem:[#allocation7 + $0xf0] sm:$0xff]
    %v265 = vld [vmem:[#allocation7 + $0xf8] sm:$0xff]
    %v266 = vld [vmem:[#allocation7 + $0x100] sm:$0xff]
    %v267 = vld [vmem:[#allocation7 + $0x108] sm:$0xff]
    %v268 = vld [vmem:[#allocation7 + $0x110] sm:$0xff]
    %v269 = vld [vmem:[#allocation7 + $0x118] sm:$0xff]
    %v270 = vld [vmem:[#allocation7 + $0x120] sm:$0xff]
    %v271 = vld [vmem:[#allocation7 + $0x128] sm:$0xff]
    %v272 = vld [vmem:[#allocation7 + $0x130] sm:$0xff]
    %v273 = vld [vmem:[#allocation7 + $0x138] sm:$0xff]
    %v274 = vld [vmem:[#allocation7 + $0x140] sm:$0xff]
    %v275 = vld [vmem:[#allocation7 + $0x148] sm:$0xff]
    %v276 = vld [vmem:[#allocation7 + $0x150] sm:$0xff]
    %v277 = vld [vmem:[#allocation7 + $0x158] sm:$0xff]
    %v278 = vld [vmem:[#allocation7 + $0x160] sm:$0xff]
    %v279 = vld [vmem:[#allocation7 + $0x168] sm:$0xff]
    %v280 = vld [vmem:[#allocation7 + $0x170] sm:$0xff]
    %v281 = vld [vmem:[#allocation7 + $0x178] sm:$0xff]
    %v282 = vld [vmem:[#allocation7 + $0x180] sm:$0xff]
    %v283 = vld [vmem:[#allocation7 + $0x188] sm:$0xff]
    %v284 = vld [vmem:[#allocation7 + $0x190] sm:$0xff]
    %v285 = vld [vmem:[#allocation7 + $0x198] sm:$0xff]
    %v286 = vld [vmem:[#allocation7 + $0x1a0] sm:$0xff]
    %v287 = vld [vmem:[#allocation7 + $0x1a8] sm:$0xff]
    %v288 = vld [vmem:[#allocation7 + $0x1b0] sm:$0xff]
    %v289 = vld [vmem:[#allocation7 + $0x1b8] sm:$0xff]
    %v290 = vld [vmem:[#allocation7 + $0x1c0] sm:$0xff]
    %v291 = vld [vmem:[#allocation7 + $0x1c8] sm:$0xff]
    %v292 = vld [vmem:[#allocation7 + $0x1d0] sm:$0xff]
    %v293 = vld [vmem:[#allocation7 + $0x1d8] sm:$0xff]
    %v294 = vld [vmem:[#allocation7 + $0x1e0] sm:$0xff]
    %v295 = vld [vmem:[#allocation7 + $0x1e8] sm:$0xff]
    %v296 = vld [vmem:[#allocation7 + $0x1f0] sm:$0xff]
    %v297 = vld [vmem:[#allocation7 + $0x1f8] sm:$0xff]
    %v298 = vld [vmem:[%s4] sm:$0x3]
    %v300 = vlaneseq
    %v301 = vshrl.u32 %v300, 7
    %v302 = vsub.s32 0, %v301
    %v303 = vrot.slane %v298, %v302
    %v304 = vlaneseq
    %v305 = vshrl.u32 %v304, 7
    %v306 = vsub.s32 1, %v305
    %v307 = vrot.slane %v298, %v306
    %310 = vmatprep.subr.mxu0 %v265
    %311 = vmatpush1.msra.mxu0 %v264
    %312 = vmatprep.subr.mxu0 %v263
    %313 = vmatpush1.msra.mxu0 %v262
    %314 = vmatprep.subr.mxu0 %v261
    %315 = vmatpush1.msra.mxu0 %v260
    %316 = vmatprep.subr.mxu0 %v259
    %317 = vmatpush1.msra.mxu0 %v258
    %318 = vmatprep.subr.mxu0 %v257
    %319 = vmatpush1.msra.mxu0 %v256
    %320 = vmatprep.subr.mxu0 %v255
    %321 = vmatpush1.msra.mxu0 %v254
    %322 = vmatprep.subr.mxu0 %v253
    %323 = vmatpush1.msra.mxu0 %v252
    %324 = vmatprep.subr.mxu0 %v251
    %325 = vmatpush1.msra.mxu0 %v250
    %326 = vmatprep.subr.mxu0 %v249
    %327 = vmatpush1.msra.mxu0 %v248
    %328 = vmatprep.subr.mxu0 %v247
    %329 = vmatpush1.msra.mxu0 %v246
    %330 = vmatprep.subr.mxu0 %v245
    %331 = vmatpush1.msra.mxu0 %v244
    %332 = vmatprep.subr.mxu0 %v243
    %333 = vmatpush1.msra.mxu0 %v242
    %334 = vmatprep.subr.mxu0 %v241
    %335 = vmatpush1.msra.mxu0 %v240
    %336 = vmatprep.subr.mxu0 %v239
    %337 = vmatpush1.msra.mxu0 %v238
    %338 = vmatprep.subr.mxu0 %v237
    %339 = vmatpush1.msra.mxu0 %v236
    %340 = vmatprep.subr.mxu0 %v235
    %341 = vmatpush1.msra.mxu0 %v234
    %342 = vmatprep.subr.mxu0 %v297
    %343 = vmatpush2.msra.mxu0 %v296
    %344 = vmatprep.subr.mxu0 %v295
    %345 = vmatpush2.msra.mxu0 %v294
    %346 = vmatprep.subr.mxu0 %v293
    %347 = vmatpush2.msra.mxu0 %v292
    %348 = vmatprep.subr.mxu0 %v291
    %349 = vmatpush2.msra.mxu0 %v290
    %350 = vmatprep.subr.mxu0 %v289
    %351 = vmatpush2.msra.mxu0 %v288
    %352 = vmatprep.subr.mxu0 %v287
    %353 = vmatpush2.msra.mxu0 %v286
    %354 = vmatprep.subr.mxu0 %v285
    %355 = vmatpush2.msra.mxu0 %v284
    %356 = vmatprep.subr.mxu0 %v283
    %357 = vmatpush2.msra.mxu0 %v282
    %358 = vmatprep.subr.mxu0 %v281
    %359 = vmatpush2.msra.mxu0 %v280
    %360 = vmatprep.subr.mxu0 %v279
    %361 = vmatpush2.msra.mxu0 %v278
    %362 = vmatprep.subr.mxu0 %v277
    %363 = vmatpush2.msra.mxu0 %v276
    %364 = vmatprep.subr.mxu0 %v275
    %365 = vmatpush2.msra.mxu0 %v274
    %366 = vmatprep.subr.mxu0 %v273
    %367 = vmatpush2.msra.mxu0 %v272
    %368 = vmatprep.subr.mxu0 %v271
    %369 = vmatpush2.msra.mxu0 %v270
    %370 = vmatprep.subr.mxu0 %v269
    %371 = vmatpush2.msra.mxu0 %v268
    %372 = vmatprep.subr.mxu0 %v267
    %373 = vmatpush2.msra.mxu0 %v266
    %374 = vmatprep.mubr.f32.mxu0 %v233
    %375 = vmatmul.mubr.f32.gmra.mxu0 %v232
    %v376 = vpop.f32.mrf.mxu0
    %v377 = vadd.f32 %v303, %v376
    %v378 = vpop.f32.mrf.mxu0
    %v379 = vadd.f32 %v307, %v378
    %380 = vdwg.mxu0
    %v381 = vtanh.pop %v377
    %v382 = vtanh.pop %v379
    %v383 = vld [vmem:[#allocation8] sm:$0xff]
    %v384 = vld [vmem:[#allocation8 + $0x8] sm:$0xff]
    %v385 = vld [vmem:[#allocation8 + $0x10] sm:$0xff]
    %v386 = vld [vmem:[#allocation8 + $0x18] sm:$0xff]
    %v387 = vld [vmem:[#allocation8 + $0x20] sm:$0xff]
    %v388 = vld [vmem:[#allocation8 + $0x28] sm:$0xff]
    %v389 = vld [vmem:[#allocation8 + $0x30] sm:$0xff]
    %v390 = vld [vmem:[#allocation8 + $0x38] sm:$0xff]
    %v391 = vld [vmem:[#allocation8 + $0x40] sm:$0xff]
    %v392 = vld [vmem:[#allocation8 + $0x48] sm:$0xff]
    %v393 = vld [vmem:[#allocation8 + $0x50] sm:$0xff]
    %v394 = vld [vmem:[#allocation8 + $0x58] sm:$0xff]
    %v395 = vld [vmem:[#allocation8 + $0x60] sm:$0xff]
    %v396 = vld [vmem:[#allocation8 + $0x68] sm:$0xff]
    %v397 = vld [vmem:[#allocation8 + $0x70] sm:$0xff]
    %v398 = vld [vmem:[#allocation8 + $0x78] sm:$0xff]
    %v399 = vld [vmem:[#allocation8 + $0x80] sm:$0xff]
    %v400 = vld [vmem:[#allocation8 + $0x88] sm:$0xff]
    %v401 = vld [vmem:[#allocation8 + $0x90] sm:$0xff]
    %v402 = vld [vmem:[#allocation8 + $0x98] sm:$0xff]
    %v403 = vld [vmem:[#allocation8 + $0xa0] sm:$0xff]
    %v404 = vld [vmem:[#allocation8 + $0xa8] sm:$0xff]
    %v405 = vld [vmem:[#allocation8 + $0xb0] sm:$0xff]
    %v406 = vld [vmem:[#allocation8 + $0xb8] sm:$0xff]
    %v407 = vld [vmem:[#allocation8 + $0xc0] sm:$0xff]
    %v408 = vld [vmem:[#allocation8 + $0xc8] sm:$0xff]
    %v409 = vld [vmem:[#allocation8 + $0xd0] sm:$0xff]
    %v410 = vld [vmem:[#allocation8 + $0xd8] sm:$0xff]
    %v411 = vld [vmem:[#allocation8 + $0xe0] sm:$0xff]
    %v412 = vld [vmem:[#allocation8 + $0xe8] sm:$0xff]
    %v413 = vld [vmem:[#allocation8 + $0xf0] sm:$0xff]
    %v414 = vld [vmem:[#allocation8 + $0xf8] sm:$0xff]
    %v415 = vld [vmem:[#allocation8 + $0x100] sm:$0xff]
    %v416 = vld [vmem:[#allocation8 + $0x108] sm:$0xff]
    %v417 = vld [vmem:[#allocation8 + $0x110] sm:$0xff]
    %v418 = vld [vmem:[#allocation8 + $0x118] sm:$0xff]
    %v419 = vld [vmem:[#allocation8 + $0x120] sm:$0xff]
    %v420 = vld [vmem:[#allocation8 + $0x128] sm:$0xff]
    %v421 = vld [vmem:[#allocation8 + $0x130] sm:$0xff]
    %v422 = vld [vmem:[#allocation8 + $0x138] sm:$0xff]
    %v423 = vld [vmem:[#allocation8 + $0x140] sm:$0xff]
    %v424 = vld [vmem:[#allocation8 + $0x148] sm:$0xff]
    %v425 = vld [vmem:[#allocation8 + $0x150] sm:$0xff]
    %v426 = vld [vmem:[#allocation8 + $0x158] sm:$0xff]
    %v427 = vld [vmem:[#allocation8 + $0x160] sm:$0xff]
    %v428 = vld [vmem:[#allocation8 + $0x168] sm:$0xff]
    %v429 = vld [vmem:[#allocation8 + $0x170] sm:$0xff]
    %v430 = vld [vmem:[#allocation8 + $0x178] sm:$0xff]
    %v431 = vld [vmem:[#allocation8 + $0x180] sm:$0xff]
    %v432 = vld [vmem:[#allocation8 + $0x188] sm:$0xff]
    %v433 = vld [vmem:[#allocation8 + $0x190] sm:$0xff]
    %v434 = vld [vmem:[#allocation8 + $0x198] sm:$0xff]
    %v435 = vld [vmem:[#allocation8 + $0x1a0] sm:$0xff]
    %v436 = vld [vmem:[#allocation8 + $0x1a8] sm:$0xff]
    %v437 = vld [vmem:[#allocation8 + $0x1b0] sm:$0xff]
    %v438 = vld [vmem:[#allocation8 + $0x1b8] sm:$0xff]
    %v439 = vld [vmem:[#allocation8 + $0x1c0] sm:$0xff]
    %v440 = vld [vmem:[#allocation8 + $0x1c8] sm:$0xff]
    %v441 = vld [vmem:[#allocation8 + $0x1d0] sm:$0xff]
    %v442 = vld [vmem:[#allocation8 + $0x1d8] sm:$0xff]
    %v443 = vld [vmem:[#allocation8 + $0x1e0] sm:$0xff]
    %v444 = vld [vmem:[#allocation8 + $0x1e8] sm:$0xff]
    %v445 = vld [vmem:[#allocation8 + $0x1f0] sm:$0xff]
    %v446 = vld [vmem:[#allocation8 + $0x1f8] sm:$0xff]
    %v447 = vld [vmem:[%s6] sm:$0x3]
    %v449 = vlaneseq
    %v450 = vshrl.u32 %v449, 7
    %v451 = vsub.s32 0, %v450
    %v452 = vrot.slane %v447, %v451
    %v453 = vlaneseq
    %v454 = vshrl.u32 %v453, 7
    %v455 = vsub.s32 1, %v454
    %v456 = vrot.slane %v447, %v455
    %459 = vmatprep.subr.mxu0 %v414
    %460 = vmatpush1.msra.mxu0 %v413
    %461 = vmatprep.subr.mxu0 %v412
    %462 = vmatpush1.msra.mxu0 %v411
    %463 = vmatprep.subr.mxu0 %v410
    %464 = vmatpush1.msra.mxu0 %v409
    %465 = vmatprep.subr.mxu0 %v408
    %466 = vmatpush1.msra.mxu0 %v407
    %467 = vmatprep.subr.mxu0 %v406
    %468 = vmatpush1.msra.mxu0 %v405
    %469 = vmatprep.subr.mxu0 %v404
    %470 = vmatpush1.msra.mxu0 %v403
    %471 = vmatprep.subr.mxu0 %v402
    %472 = vmatpush1.msra.mxu0 %v401
    %473 = vmatprep.subr.mxu0 %v400
    %474 = vmatpush1.msra.mxu0 %v399
    %475 = vmatprep.subr.mxu0 %v398
    %476 = vmatpush1.msra.mxu0 %v397
    %477 = vmatprep.subr.mxu0 %v396
    %478 = vmatpush1.msra.mxu0 %v395
    %479 = vmatprep.subr.mxu0 %v394
    %480 = vmatpush1.msra.mxu0 %v393
    %481 = vmatprep.subr.mxu0 %v392
    %482 = vmatpush1.msra.mxu0 %v391
    %483 = vmatprep.subr.mxu0 %v390
    %484 = vmatpush1.msra.mxu0 %v389
    %485 = vmatprep.subr.mxu0 %v388
    %486 = vmatpush1.msra.mxu0 %v387
    %487 = vmatprep.subr.mxu0 %v386
    %488 = vmatpush1.msra.mxu0 %v385
    %489 = vmatprep.subr.mxu0 %v384
    %490 = vmatpush1.msra.mxu0 %v383
    %491 = vmatprep.subr.mxu0 %v446
    %492 = vmatpush2.msra.mxu0 %v445
    %493 = vmatprep.subr.mxu0 %v444
    %494 = vmatpush2.msra.mxu0 %v443
    %495 = vmatprep.subr.mxu0 %v442
    %496 = vmatpush2.msra.mxu0 %v441
    %497 = vmatprep.subr.mxu0 %v440
    %498 = vmatpush2.msra.mxu0 %v439
    %499 = vmatprep.subr.mxu0 %v438
    %500 = vmatpush2.msra.mxu0 %v437
    %501 = vmatprep.subr.mxu0 %v436
    %502 = vmatpush2.msra.mxu0 %v435
    %503 = vmatprep.subr.mxu0 %v434
    %504 = vmatpush2.msra.mxu0 %v433
    %505 = vmatprep.subr.mxu0 %v432
    %506 = vmatpush2.msra.mxu0 %v431
    %507 = vmatprep.subr.mxu0 %v430
    %508 = vmatpush2.msra.mxu0 %v429
    %509 = vmatprep.subr.mxu0 %v428
    %510 = vmatpush2.msra.mxu0 %v427
    %511 = vmatprep.subr.mxu0 %v426
    %512 = vmatpush2.msra.mxu0 %v425
    %513 = vmatprep.subr.mxu0 %v424
    %514 = vmatpush2.msra.mxu0 %v423
    %515 = vmatprep.subr.mxu0 %v422
    %516 = vmatpush2.msra.mxu0 %v421
    %517 = vmatprep.subr.mxu0 %v420
    %518 = vmatpush2.msra.mxu0 %v419
    %519 = vmatprep.subr.mxu0 %v418
    %520 = vmatpush2.msra.mxu0 %v417
    %521 = vmatprep.subr.mxu0 %v416
    %522 = vmatpush2.msra.mxu0 %v415
    %523 = vmatprep.mubr.f32.mxu0 %v382
    %524 = vmatmul.mubr.f32.gmra.mxu0 %v381
    %v525 = vpop.f32.mrf.mxu0
    %v526 = vadd.f32 %v452, %v525
    %v527 = vpop.f32.mrf.mxu0
    %v528 = vadd.f32 %v456, %v527
    %529 = vdwg.mxu0
    %v530 = vtanh.pop %v526
    %v531 = vtanh.pop %v528
    %v532 = vld [vmem:[#allocation10] sm:$0xff]
    %v533 = vld [vmem:[#allocation10 + $0x8] sm:$0xff]
    %v534 = vld [vmem:[#allocation10 + $0x10] sm:$0xff]
    %v535 = vld [vmem:[#allocation10 + $0x18] sm:$0xff]
    %v536 = vld [vmem:[#allocation10 + $0x20] sm:$0xff]
    %v537 = vld [vmem:[#allocation10 + $0x28] sm:$0xff]
    %v538 = vld [vmem:[#allocation10 + $0x30] sm:$0xff]
    %v539 = vld [vmem:[#allocation10 + $0x38] sm:$0xff]
    %v540 = vld [vmem:[#allocation10 + $0x40] sm:$0xff]
    %v541 = vld [vmem:[#allocation10 + $0x48] sm:$0xff]
    %v542 = vld [vmem:[#allocation10 + $0x50] sm:$0xff]
    %v543 = vld [vmem:[#allocation10 + $0x58] sm:$0xff]
    %v544 = vld [vmem:[#allocation10 + $0x60] sm:$0xff]
    %v545 = vld [vmem:[#allocation10 + $0x68] sm:$0xff]
    %v546 = vld [vmem:[#allocation10 + $0x70] sm:$0xff]
    %v547 = vld [vmem:[#allocation10 + $0x78] sm:$0xff]
    %v548 = vld [vmem:[#allocation10 + $0x80] sm:$0xff]
    %v549 = vld [vmem:[#allocation10 + $0x88] sm:$0xff]
    %v550 = vld [vmem:[#allocation10 + $0x90] sm:$0xff]
    %v551 = vld [vmem:[#allocation10 + $0x98] sm:$0xff]
    %v552 = vld [vmem:[#allocation10 + $0xa0] sm:$0xff]
    %v553 = vld [vmem:[#allocation10 + $0xa8] sm:$0xff]
    %v554 = vld [vmem:[#allocation10 + $0xb0] sm:$0xff]
    %v555 = vld [vmem:[#allocation10 + $0xb8] sm:$0xff]
    %v556 = vld [vmem:[#allocation10 + $0xc0] sm:$0xff]
    %v557 = vld [vmem:[#allocation10 + $0xc8] sm:$0xff]
    %v558 = vld [vmem:[#allocation10 + $0xd0] sm:$0xff]
    %v559 = vld [vmem:[#allocation10 + $0xd8] sm:$0xff]
    %v560 = vld [vmem:[#allocation10 + $0xe0] sm:$0xff]
    %v561 = vld [vmem:[#allocation10 + $0xe8] sm:$0xff]
    %v562 = vld [vmem:[#allocation10 + $0xf0] sm:$0xff]
    %v563 = vld [vmem:[#allocation10 + $0xf8] sm:$0xff]
    %v564 = vld [vmem:[%s8] sm:$0x1]
    %565 = vmatprep.subr.mxu0 0.0
    %566 = vmatpush1.msra.mxu0 %v547
    %567 = vmatprep.subr.mxu0 0.0
    %568 = vmatpush1.msra.mxu0 %v546
    %569 = vmatprep.subr.mxu0 0.0
    %570 = vmatpush1.msra.mxu0 %v545
    %571 = vmatprep.subr.mxu0 0.0
    %572 = vmatpush1.msra.mxu0 %v544
    %573 = vmatprep.subr.mxu0 0.0
    %574 = vmatpush1.msra.mxu0 %v543
    %575 = vmatprep.subr.mxu0 0.0
    %576 = vmatpush1.msra.mxu0 %v542
    %577 = vmatprep.subr.mxu0 0.0
    %578 = vmatpush1.msra.mxu0 %v541
    %579 = vmatprep.subr.mxu0 0.0
    %580 = vmatpush1.msra.mxu0 %v540
    %581 = vmatprep.subr.mxu0 0.0
    %582 = vmatpush1.msra.mxu0 %v539
    %583 = vmatprep.subr.mxu0 0.0
    %584 = vmatpush1.msra.mxu0 %v538
    %585 = vmatprep.subr.mxu0 0.0
    %586 = vmatpush1.msra.mxu0 %v537
    %587 = vmatprep.subr.mxu0 0.0
    %588 = vmatpush1.msra.mxu0 %v536
    %589 = vmatprep.subr.mxu0 0.0
    %590 = vmatpush1.msra.mxu0 %v535
    %591 = vmatprep.subr.mxu0 0.0
    %592 = vmatpush1.msra.mxu0 %v534
    %593 = vmatprep.subr.mxu0 0.0
    %594 = vmatpush1.msra.mxu0 %v533
    %595 = vmatprep.subr.mxu0 0.0
    %596 = vmatpush1.msra.mxu0 %v532
    %597 = vmatprep.subr.mxu0 0.0
    %598 = vmatpush2.msra.mxu0 %v563
    %599 = vmatprep.subr.mxu0 0.0
    %600 = vmatpush2.msra.mxu0 %v562
    %601 = vmatprep.subr.mxu0 0.0
    %602 = vmatpush2.msra.mxu0 %v561
    %603 = vmatprep.subr.mxu0 0.0
    %604 = vmatpush2.msra.mxu0 %v560
    %605 = vmatprep.subr.mxu0 0.0
    %606 = vmatpush2.msra.mxu0 %v559
    %607 = vmatprep.subr.mxu0 0.0
    %608 = vmatpush2.msra.mxu0 %v558
    %609 = vmatprep.subr.mxu0 0.0
    %610 = vmatpush2.msra.mxu0 %v557
    %611 = vmatprep.subr.mxu0 0.0
    %612 = vmatpush2.msra.mxu0 %v556
    %613 = vmatprep.subr.mxu0 0.0
    %614 = vmatpush2.msra.mxu0 %v555
    %615 = vmatprep.subr.mxu0 0.0
    %616 = vmatpush2.msra.mxu0 %v554
    %617 = vmatprep.subr.mxu0 0.0
    %618 = vmatpush2.msra.mxu0 %v553
    %619 = vmatprep.subr.mxu0 0.0
    %620 = vmatpush2.msra.mxu0 %v552
    %621 = vmatprep.subr.mxu0 0.0
    %622 = vmatpush2.msra.mxu0 %v551
    %623 = vmatprep.subr.mxu0 0.0
    %624 = vmatpush2.msra.mxu0 %v550
    %625 = vmatprep.subr.mxu0 0.0
    %626 = vmatpush2.msra.mxu0 %v549
    %627 = vmatprep.subr.mxu0 0.0
    %628 = vmatpush2.msra.mxu0 %v548
    %629 = vmatprep.mubr.f32.mxu0 %v531
    %630 = vmatmul.mubr.f32.gmra.mxu0 %v530
    %v631 = vpop.f32.mrf.mxu0
    %v632 = vadd.f32 %v564, %v631
    %v633 = vpop.f32.mrf.mxu0
    %634 = vdwg.mxu0
    %vm635 = vcmask 1040384
    %v636 = vsel %vm635, %v632, -inf
    %637 = vmax.xlane.f32.xlu0 %v636
    %v638 = vpop.xlane.xlu0 %637
    %v639 = vsub.f32 %v632, %v638
    %v640 = vmul.f32 %v639, 1.442695
    %v641 = vpow.pop %v640
    %v642 = vld [vmem:[#allocation11] sm:$0xff]
    %v643 = vld [vmem:[#allocation11 + $0x8] sm:$0xff]
    %v644 = vld [vmem:[#allocation11 + $0x10] sm:$0xff]
    %v645 = vld [vmem:[#allocation11 + $0x18] sm:$0xff]
    %v646 = vld [vmem:[#allocation11 + $0x20] sm:$0xff]
    %v647 = vld [vmem:[#allocation11 + $0x28] sm:$0xff]
    %v648 = vld [vmem:[#allocation11 + $0x30] sm:$0xff]
    %v649 = vld [vmem:[#allocation11 + $0x38] sm:$0xff]
    %v650 = vld [vmem:[#allocation11 + $0x40] sm:$0xff]
    %v651 = vld [vmem:[#allocation11 + $0x48] sm:$0xff]
    %v652 = vld [vmem:[#allocation11 + $0x50] sm:$0xff]
    %v653 = vld [vmem:[#allocation11 + $0x58] sm:$0xff]
    %v654 = vld [vmem:[#allocation11 + $0x60] sm:$0xff]
    %v655 = vld [vmem:[#allocation11 + $0x68] sm:$0xff]
    %v656 = vld [vmem:[#allocation11 + $0x70] sm:$0xff]
    %v657 = vld [vmem:[#allocation11 + $0x78] sm:$0xff]
    %658 = vmatprep.subr.mxu0 0.0
    %659 = vmatpush1.msra.mxu0 %v657
    %660 = vmatprep.subr.mxu0 0.0
    %661 = vmatpush1.msra.mxu0 %v656
    %662 = vmatprep.subr.mxu0 0.0
    %663 = vmatpush1.msra.mxu0 %v655
    %664 = vmatprep.subr.mxu0 0.0
    %665 = vmatpush1.msra.mxu0 %v654
    %666 = vmatprep.subr.mxu0 0.0
    %667 = vmatpush1.msra.mxu0 %v653
    %668 = vmatprep.subr.mxu0 0.0
    %669 = vmatpush1.msra.mxu0 %v652
    %670 = vmatprep.subr.mxu0 0.0
    %671 = vmatpush1.msra.mxu0 %v651
    %672 = vmatprep.subr.mxu0 0.0
    %673 = vmatpush1.msra.mxu0 %v650
    %674 = vmatprep.subr.mxu0 0.0
    %675 = vmatpush1.msra.mxu0 %v649
    %676 = vmatprep.subr.mxu0 0.0
    %677 = vmatpush1.msra.mxu0 %v648
    %678 = vmatprep.subr.mxu0 0.0
    %679 = vmatpush1.msra.mxu0 %v647
    %680 = vmatprep.subr.mxu0 0.0
    %681 = vmatpush1.msra.mxu0 %v646
    %682 = vmatprep.subr.mxu0 0.0
    %683 = vmatpush1.msra.mxu0 %v645
    %684 = vmatprep.subr.mxu0 0.0
    %685 = vmatpush1.msra.mxu0 %v644
    %686 = vmatprep.subr.mxu0 0.0
    %687 = vmatpush1.msra.mxu0 %v643
    %688 = vmatprep.subr.mxu0 0.0
    %689 = vmatpush1.msra.mxu0 %v642
    %690 = vmatprep.subr.mxu0 0.0
    %691 = vmatpush2.msra.mxu0 0.0
    %692 = vmatprep.subr.mxu0 0.0
    %693 = vmatpush2.msra.mxu0 0.0
    %694 = vmatprep.subr.mxu0 0.0
    %695 = vmatpush2.msra.mxu0 0.0
    %696 = vmatprep.subr.mxu0 0.0
    %697 = vmatpush2.msra.mxu0 0.0
    %698 = vmatprep.subr.mxu0 0.0
    %699 = vmatpush2.msra.mxu0 0.0
    %700 = vmatprep.subr.mxu0 0.0
    %701 = vmatpush2.msra.mxu0 0.0
    %702 = vmatprep.subr.mxu0 0.0
    %703 = vmatpush2.msra.mxu0 0.0
    %704 = vmatprep.subr.mxu0 0.0
    %705 = vmatpush2.msra.mxu0 0.0
    %706 = vmatprep.subr.mxu0 0.0
    %707 = vmatpush2.msra.mxu0 0.0
    %708 = vmatprep.subr.mxu0 0.0
    %709 = vmatpush2.msra.mxu0 0.0
    %710 = vmatprep.subr.mxu0 0.0
    %711 = vmatpush2.msra.mxu0 0.0
    %712 = vmatprep.subr.mxu0 0.0
    %713 = vmatpush2.msra.mxu0 0.0
    %714 = vmatprep.subr.mxu0 0.0
    %715 = vmatpush2.msra.mxu0 0.0
    %716 = vmatprep.subr.mxu0 0.0
    %717 = vmatpush2.msra.mxu0 0.0
    %718 = vmatprep.subr.mxu0 0.0
    %719 = vmatpush2.msra.mxu0 0.0
    %720 = vmatprep.subr.mxu0 0.0
    %721 = vmatpush2.msra.mxu0 0.0
    %722 = vmatprep.mubr.f32.mxu0 0.0
    %723 = vmatmul.mubr.f32.gmra.mxu0 %v641
    %v724 = vpop.f32.mrf.mxu0
    %v725 = vadd.f32 0.0, %v724
    %v726 = vpop.f32.mrf.mxu0
    %727 = vdwg.mxu0
    %v728 = vrcp.pop %v725
    %v729 = vmul.f32 %v641, %v728
    %730 = vst [vmem:[#allocation13] sm:$0x1] %v729
    // Predicated region
    $region66: #{tpu_custom_call.1} parent=1 // pred_check
      _
    $region67: #{tpu_custom_call.1} parent=1 // pred_check_branch
      %732 = sbr.rel (0) target = $region69
    $region68: #{tpu_custom_call.1} parent=1 // pred_region
      %s734 = ssub.s32 16, 16
      %735 = vsyncadd [#allocation4], %s734
      %s737 = sshll.u32 [#allocation13], 4
      %s738 = int_to_ptr.vmem [resolvable:$true] %s737
      %740 = dma.vmem_to_hbm [thread:$0]  %s738, 16, %s10, [#allocation4]
    $region69: #{tpu_custom_call.1} parent=1 // pred_fallthru
      _
    // Predicated region
    $region70: #{tpu_custom_call.1} parent=1 // pred_check
      _
    $region71: #{tpu_custom_call.1} parent=1 // pred_check_branch
      %742 = sbr.rel (0) target = $region73
    $region72: #{tpu_custom_call.1} parent=1 // pred_region
      %743 = dma.done [#allocation4], 16
    $region73: #{tpu_custom_call.1} parent=1 // pred_fallthru
      _
    %744 = vsyncpa [#allocation3], 1
    %745 = vsyncpa [#allocation6], 1
    %746 = vsyncpa [#allocation9], 1
    %747 = vsyncpa [#allocation12], 1
    %748 = vsyncpa [#allocation4], 1

</llo_original>
